<compile_context>
chip_gen: v7x
topology: tpu7x:2x2x1
jax: 0.10.0
libtpu: 0.0.40
codegen_flags: <defaults>
</compile_context>

<pallas_src>
import functools

import jax
import jax.numpy as jnp
from jax.experimental import pallas as pl
from jax.experimental.pallas import tpu as pltpu

MAX_TE = 2048  # maximum edge tile (multiple of 128)


def _round_up(x, m):
    return ((x + m - 1) // m) * m


def _choose_edge_tile(E, max_te=MAX_TE):
    """Edge tile: multiple of 128, as large as allowed, padding waste bounded to <= 1 block
    (or <= 12.5%), and >= 2 grid steps whenever E allows it (v7x has 2 TensorCores)."""
    nb = -(-E // 128)                       # 128-edge blocks after minimal padding
    max_k = max(1, max_te // 128)
    best_k = 1
    for k in range(1, min(max_k, nb) + 1):
        nb_pad = -(-nb // k) * k
        if nb >= 2 and nb_pad // k < 2:     # keep >= 2 grid steps when possible
            continue
        if nb_pad - nb <= max(1, nb // 8):  # bound the padding waste
            best_k = k
    return 128 * best_k


def _edge_type_kernel(h_ref, lbl_ref, w1_ref, b1_ref, w2_ref, b2_ref, nll_ref):
    # h_ref:   [TE, 2D] bf16   (concat(h_src, h_dst) tile)
    # lbl_ref: [1, TE]  int32  (target class per edge)
    # w1_ref:  [2D, H]  bf16,  b1_ref: [1, H] f32
    # w2_ref:  [H, C]   bf16,  b2_ref: [1, C] f32
    # nll_ref: [1, TE]  f32    (per-edge cross-entropy, lane-dense)

    # decoder: Linear(2D->H) -> ReLU -> Linear(H->C); bf16 operands, f32 MXU accumulation.
    z1 = (jnp.dot(h_ref[...], w1_ref[...], preferred_element_type=jnp.float32)
          + b1_ref[...])                                       # [TE, H] f32
    a = jnp.maximum(z1, 0.0).astype(jnp.bfloat16)              # ReLU, back to bf16 for MXU
    logits = (jnp.dot(a, w2_ref[...], preferred_element_type=jnp.float32)
              + b2_ref[...])                                    # [TE, C] f32

    # Class-major view so per-edge scalars come out lane-dense ([1, TE]).
    lt = jnp.transpose(logits)                                  # [C, TE] (XLU)

    # numerically-stable log-sum-exp over classes (sublane axis)
    m = jnp.max(lt, axis=0, keepdims=True)                      # [1, TE]
    lse = m + jnp.log(jnp.sum(jnp.exp(lt - m), axis=0, keepdims=True))

    # gather the target-class logit via an iota compare (no one-hot in the kernel)
    cls = jax.lax.broadcasted_iota(jnp.int32, lt.shape, 0)      # [C, TE]
    picked = jnp.sum(jnp.where(cls == lbl_ref[...], lt, 0.0),
                     axis=0, keepdims=True)                     # [1, TE]

    nll_ref[...] = lse - picked                                 # [1, TE]


def _per_edge_nll(h_src, h_dst, labels, params, tile_edges=None):
    """Per-edge cross-entropy NLL (reduction='none') via a single Pallas kernel.
    Must be called from inside a jit so the concat/cast/pad fuses into one HBM pass."""
    E, D = h_src.shape
    H = params["w1"].shape[1]
    C = params["w2"].shape[1]

    te = tile_edges if tile_edges is not None else _choose_edge_tile(E)
    E_pad = _round_up(E, te)
    pad = E_pad - E

    # Activations streamed as bf16; concat + cast + pad is one fused XLA pass.
    h_cat = jnp.concatenate([h_src, h_dst], axis=1).astype(jnp.bfloat16)   # [E, 2D]
    lbl = labels.astype(jnp.int32)
    if pad:
        h_cat = jnp.pad(h_cat, ((0, pad), (0, 0)))
        lbl = jnp.pad(lbl, ((0, pad),))
    lbl2d = lbl.reshape(1, E_pad)

    w1 = params["w1"].astype(jnp.bfloat16)                      # [2D, H] (resident)
    b1 = params["b1"].astype(jnp.float32).reshape(1, H)
    w2 = params["w2"].astype(jnp.bfloat16)                      # [H, C]  (resident)
    b2 = params["b2"].astype(jnp.float32).reshape(1, C)

    resident = lambda i: (0, 0)

    cost = pl.CostEstimate(
        flops=2 * E_pad * (2 * D * H + H * C),
        transcendentals=E_pad * (C + 1),
        bytes_accessed=(E_pad * (2 * D * 2 + 4 + 4)             # h_cat + labels + nll out
                        + (2 * D * H + H * C) * 2               # bf16 weights
                        + (H + C) * 4),                         # f32 biases
    )

    nll2d = pl.pallas_call(
        _edge_type_kernel,
        out_shape=jax.ShapeDtypeStruct((1, E_pad), jnp.float32),
        grid_spec=pltpu.PrefetchScalarGridSpec(
            num_scalar_prefetch=0,
            grid=(E_pad // te,),
            in_specs=[
                pl.BlockSpec((te, 2 * D), lambda i: (i, 0)),    # concat activation tile
                pl.BlockSpec((1, te), lambda i: (0, i)),        # int32 label row
                pl.BlockSpec((2 * D, H), resident),             # W1 (bf16, resident)
                pl.BlockSpec((1, H), resident),                 # b1 (f32)
                pl.BlockSpec((H, C), resident),                 # W2 (bf16, resident)
                pl.BlockSpec((1, C), resident),                 # b2 (f32)
            ],
            out_specs=pl.BlockSpec((1, te), lambda i: (0, i)),  # lane-dense NLL row
        ),
        compiler_params=pltpu.CompilerParams(
            dimension_semantics=("parallel",)),
        cost_estimate=cost,
    )(h_cat, lbl2d, w1, b1, w2, b2)

    return nll2d[0, :E]                                         # per-edge NLL


def compute_class_weights(edge_type_onehot, num_classes):
    # inverse-frequency weights: total / (num_classes * count_c), count clamped to >= 1
    counts = jnp.sum(edge_type_onehot, axis=0)
    total = jnp.sum(counts)
    return total / (num_classes * jnp.maximum(counts, 1.0))


@functools.partial(jax.jit,
                   static_argnames=("balanced_loss", "edge_type_dim", "inference",
                                    "tile_edges"))
def edge_type_prediction_forward(h_src, h_dst, edge_type, params, *,
                                 balanced_loss, edge_type_dim, inference,
                                 tile_edges=None):
    """Pallas-backed forward of EdgeTypePrediction. Returns {'loss': ...}."""
    # argmax (and, if balanced, the class counts) read the one-hot in one fused XLA pass.
    y = jnp.argmax(edge_type, axis=1).astype(jnp.int32)         # == edge_type.argmax(dim=1)
    per_edge_nll = _per_edge_nll(h_src, h_dst, y, params, tile_edges=tile_edges)

    if inference:
        # reduction='none': per-edge loss used as anomaly score
        return {"loss": per_edge_nll}

    if balanced_loss:
        class_weights = compute_class_weights(edge_type.astype(jnp.float32),
                                              edge_type_dim)
        w = class_weights[y]
        # PyTorch weighted cross_entropy 'mean' semantics: sum(w*nll)/sum(w)
        loss = jnp.sum(w * per_edge_nll) / jnp.sum(w)
    else:
        loss = jnp.mean(per_edge_nll)
    return {"loss": loss}


def _reference_forward(h_src, h_dst, edge_type, params, *,
                       balanced_loss, edge_type_dim, inference):
    """Pure-JAX reference (mirrors the kernel's bf16 operand casts)."""
    h_cat = jnp.concatenate([h_src, h_dst], axis=1).astype(jnp.bfloat16)
    z1 = (jnp.dot(h_cat, params["w1"].astype(jnp.bfloat16),
                  preferred_element_type=jnp.float32)
          + params["b1"].reshape(1, -1))
    a = jnp.maximum(z1, 0.0).astype(jnp.bfloat16)
    logits = (jnp.dot(a, params["w2"].astype(jnp.bfloat16),
                      preferred_element_type=jnp.float32)
              + params["b2"].reshape(1, -1))
    logp = jax.nn.log_softmax(logits, axis=-1)
    y = jnp.argmax(edge_type, axis=1)
    nll = -jnp.take_along_axis(logp, y[:, None], axis=1)[:, 0]
    if inference:
        return nll
    if balanced_loss:
        cw = compute_class_weights(edge_type.astype(jnp.float32), edge_type_dim)
        w = cw[y]
        return jnp.sum(w * nll) / jnp.sum(w)
    return jnp.mean(nll)


if __name__ == "__main__":
    # edges, node-embedding dim, decoder hidden, edge_type_dim
    E, D, H, C = 600, 32, 64, 8   # E=600 -> te=384, E_pad=768, 2 grid steps

    key = jax.random.PRNGKey(0)
    k1, k2, k3, k4, k5, k6 = jax.random.split(key, 6)

    h_src = jax.random.normal(k1, (E, D), dtype=jnp.float32)
    h_dst = jax.random.normal(k2, (E, D), dtype=jnp.float32)
    classes = jax.random.randint(k3, (E,), 0, C)
    edge_type = jax.nn.one_hot(classes, C, dtype=jnp.float32)   # one-hot labels

    # deterministic synthetic decoder parameters (Linear(2D->H) -> ReLU -> Linear(H->C))
    params = {
        "w1": 0.1 * jax.random.normal(k4, (2 * D, H), dtype=jnp.float32),
        "b1": 0.01 * jax.random.normal(k5, (H,), dtype=jnp.float32),
        "w2": 0.1 * jax.random.normal(k6, (H, C), dtype=jnp.float32),
        "b2": jnp.zeros((C,), dtype=jnp.float32),
    }

    cfg = dict(balanced_loss=True, edge_type_dim=C)

    # training-mode (reduced, class-weighted) loss
    out_train = edge_type_prediction_forward(
        h_src, h_dst, edge_type, params, inference=False, **cfg)
    jax.block_until_ready(out_train["loss"])

    # inference-mode per-edge losses (anomaly scores)
    out_inf = edge_type_prediction_forward(
        h_src, h_dst, edge_type, params, inference=True, **cfg)
    jax.block_until_ready(out_inf["loss"])

    # validate against the pure-JAX reference
    ref_train = _reference_forward(h_src, h_dst, edge_type, params,
                                   inference=False, **cfg)
    ref_inf = _reference_forward(h_src, h_dst, edge_type, params,
                                 inference=True, **cfg)
    assert jnp.allclose(out_train["loss"], ref_train, atol=1e-3, rtol=1e-3)
    assert jnp.allclose(out_inf["loss"], ref_inf, atol=2e-3, rtol=2e-3)

    print("KERNEL_OK")
</pallas_src>

<mosaic_0001>
module attributes {stable_mosaic.version = 11 : i64} {
  func.func @_edge_type_kernel(%arg0: i32, %arg1: memref<384x64xbf16, #tpu.memory_space<vmem>>, %arg2: memref<1x384xi32, #tpu.memory_space<vmem>>, %arg3: memref<64x64xbf16, #tpu.memory_space<vmem>>, %arg4: memref<1x64xf32, #tpu.memory_space<vmem>>, %arg5: memref<64x8xbf16, #tpu.memory_space<vmem>>, %arg6: memref<1x8xf32, #tpu.memory_space<vmem>>, %arg7: memref<1x384xf32, #tpu.memory_space<vmem>>) attributes {dimension_semantics = [#tpu.dimension_semantics<parallel>], iteration_bounds = array<i64: 2>, scalar_prefetch = 0 : i64, scratch_operands = 0 : i64, tpu.core_type = #tpu.core_type<tc>, window_params = [{transform_indices = @transform_0, window_bounds = array<i64: 384, 64>}, {transform_indices = @transform_1, window_bounds = array<i64: 1, 384>}, {pipeline_mode = #tpu.pipeline_mode<synchronous>, transform_indices = @transform_2, window_bounds = array<i64: 64, 64>}, {pipeline_mode = #tpu.pipeline_mode<synchronous>, transform_indices = @transform_3, window_bounds = array<i64: 1, 64>}, {pipeline_mode = #tpu.pipeline_mode<synchronous>, transform_indices = @transform_4, window_bounds = array<i64: 64, 8>}, {pipeline_mode = #tpu.pipeline_mode<synchronous>, transform_indices = @transform_5, window_bounds = array<i64: 1, 8>}, {transform_indices = @transform_6, window_bounds = array<i64: 1, 384>}]} {
    %c0 = arith.constant 0 : index
    %c0_0 = arith.constant 0 : index
    %0 = vector.load %arg1[%c0, %c0_0] : memref<384x64xbf16, #tpu.memory_space<vmem>>, vector<384x64xbf16>
    %c0_1 = arith.constant 0 : index
    %c0_2 = arith.constant 0 : index
    %1 = vector.load %arg3[%c0_1, %c0_2] : memref<64x64xbf16, #tpu.memory_space<vmem>>, vector<64x64xbf16>
    %cst = arith.constant dense<0.000000e+00> : vector<384x64xf32>
    %2 = tpu.matmul %0, %1, %cst {dimension_numbers = #tpu.dot_dimension_numbers<[1], [0], [0], [1], [0, 0, 1, 1], [], []>} : vector<384x64xbf16>, vector<64x64xbf16>, vector<384x64xf32> -> vector<384x64xf32>
    %c0_3 = arith.constant 0 : index
    %c0_4 = arith.constant 0 : index
    %3 = vector.load %arg4[%c0_3, %c0_4] : memref<1x64xf32, #tpu.memory_space<vmem>>, vector<1x64xf32>
    %4 = vector.broadcast %3 : vector<1x64xf32> to vector<384x64xf32>
    %5 = arith.addf %2, %4 : vector<384x64xf32>
    %cst_5 = arith.constant 0.000000e+00 : f32
    %6 = vector.broadcast %cst_5 : f32 to vector<384x64xf32>
    %7 = arith.maximumf %5, %6 : vector<384x64xf32>
    %8 = arith.truncf %7 : vector<384x64xf32> to vector<384x64xbf16>
    %c0_6 = arith.constant 0 : index
    %c0_7 = arith.constant 0 : index
    %9 = vector.load %arg5[%c0_6, %c0_7] : memref<64x8xbf16, #tpu.memory_space<vmem>>, vector<64x8xbf16>
    %cst_8 = arith.constant dense<0.000000e+00> : vector<384x8xf32>
    %10 = tpu.matmul %8, %9, %cst_8 {dimension_numbers = #tpu.dot_dimension_numbers<[1], [0], [0], [1], [0, 0, 1, 1], [], []>} : vector<384x64xbf16>, vector<64x8xbf16>, vector<384x8xf32> -> vector<384x8xf32>
    %c0_9 = arith.constant 0 : index
    %c0_10 = arith.constant 0 : index
    %11 = vector.load %arg6[%c0_9, %c0_10] : memref<1x8xf32, #tpu.memory_space<vmem>>, vector<1x8xf32>
    %12 = vector.broadcast %11 : vector<1x8xf32> to vector<384x8xf32>
    %13 = arith.addf %10, %12 : vector<384x8xf32>
    %14 = tpu.transpose %13, [1, 0] : vector<384x8xf32> -> vector<8x384xf32>
    %cst_11 = arith.constant dense<0xFF800000> : vector<384xf32>
    %15 = vector.multi_reduction <maximumf>, %14, %cst_11 [0] : vector<8x384xf32> to vector<384xf32>
    %16 = vector.shape_cast %15 : vector<384xf32> to vector<1x384xf32>
    %17 = vector.broadcast %16 : vector<1x384xf32> to vector<8x384xf32>
    %18 = arith.subf %14, %17 : vector<8x384xf32>
    %19 = math.exp %18 : vector<8x384xf32>
    %cst_12 = arith.constant dense<0.000000e+00> : vector<384xf32>
    %20 = vector.multi_reduction <add>, %19, %cst_12 [0] : vector<8x384xf32> to vector<384xf32>
    %21 = vector.shape_cast %20 : vector<384xf32> to vector<1x384xf32>
    %22 = math.log %21 : vector<1x384xf32>
    %23 = arith.addf %16, %22 : vector<1x384xf32>
    %24 = tpu.iota {dimensions = array<i32: 0>} : vector<8x384xi32>
    %c0_13 = arith.constant 0 : index
    %c0_14 = arith.constant 0 : index
    %25 = vector.load %arg2[%c0_13, %c0_14] : memref<1x384xi32, #tpu.memory_space<vmem>>, vector<1x384xi32>
    %26 = vector.broadcast %25 : vector<1x384xi32> to vector<8x384xi32>
    %27 = arith.cmpi eq, %24, %26 : vector<8x384xi32>
    %cst_15 = arith.constant 0.000000e+00 : f32
    %28 = vector.broadcast %cst_15 : f32 to vector<8x384xf32>
    %29 = arith.select %27, %14, %28 : vector<8x384xi1>, vector<8x384xf32>
    %cst_16 = arith.constant dense<0.000000e+00> : vector<384xf32>
    %30 = vector.multi_reduction <add>, %29, %cst_16 [0] : vector<8x384xf32> to vector<384xf32>
    %31 = vector.shape_cast %30 : vector<384xf32> to vector<1x384xf32>
    %32 = arith.subf %23, %31 : vector<1x384xf32>
    %c0_17 = arith.constant 0 : index
    %c0_18 = arith.constant 0 : index
    %33 = vector.load %arg7[%c0_17, %c0_18] : memref<1x384xf32, #tpu.memory_space<vmem>>, vector<1x384xf32>
    tpu.vector_store %arg7[%c0_17, %c0_18], %32 {strides = array<i32>} : memref<1x384xf32, #tpu.memory_space<vmem>>, vector<1x384xf32>,
    return
  }
  func.func @transform_0(%arg0: i32) -> (i32, i32) {
    %c0_i32 = arith.constant 0 : i32
    %c0_i32_0 = arith.constant 0 : i32
    return %arg0, %c0_i32 : i32, i32
  }
  func.func @transform_1(%arg0: i32) -> (i32, i32) {
    %c0_i32 = arith.constant 0 : i32
    %c0_i32_0 = arith.constant 0 : i32
    return %c0_i32, %arg0 : i32, i32
  }
  func.func @transform_2(%arg0: i32) -> (i32, i32) {
    %c0_i32 = arith.constant 0 : i32
    %c0_i32_0 = arith.constant 0 : i32
    %c0_i32_1 = arith.constant 0 : i32
    return %c0_i32, %c0_i32_0 : i32, i32
  }
  func.func @transform_3(%arg0: i32) -> (i32, i32) {
    %c0_i32 = arith.constant 0 : i32
    %c0_i32_0 = arith.constant 0 : i32
    %c0_i32_1 = arith.constant 0 : i32
    return %c0_i32, %c0_i32_0 : i32, i32
  }
  func.func @transform_4(%arg0: i32) -> (i32, i32) {
    %c0_i32 = arith.constant 0 : i32
    %c0_i32_0 = arith.constant 0 : i32
    %c0_i32_1 = arith.constant 0 : i32
    return %c0_i32, %c0_i32_0 : i32, i32
  }
  func.func @transform_5(%arg0: i32) -> (i32, i32) {
    %c0_i32 = arith.constant 0 : i32
    %c0_i32_0 = arith.constant 0 : i32
    %c0_i32_1 = arith.constant 0 : i32
    return %c0_i32, %c0_i32_0 : i32, i32
  }
  func.func @transform_6(%arg0: i32) -> (i32, i32) {
    %c0_i32 = arith.constant 0 : i32
    %c0_i32_0 = arith.constant 0 : i32
    return %c0_i32, %arg0 : i32, i32
  }
}

</mosaic_0001>

<llo_original>
// kernel: edge_type_prediction_forward.1
$region0: #{edge_type_prediction_forward.1}
  #allocation0 [shape = 'u32[]', space=smem, size = 0x4, offset = 0x4, fixed_abs, tag = 'smem constant byte address 0x4 - core index']
  #allocation1 [shape = 'u32[144,128]{1,0:T(1,128)}', space=vmem, size = 0x12000, scoped, tag = 'internal scratch']
  %s0 = inlined_call_operand.vmem [shape: bf16[768,64], index: 0, kind: input, shape index: {}]
  %s1 = inlined_call_operand.vmem [shape: s32[1,768], index: 1, kind: input, shape index: {}]
  %s2 = inlined_call_operand.vmem [shape: bf16[64,64], index: 2, kind: input, shape index: {}]
  %s3 = inlined_call_operand.vmem [shape: f32[1,64], index: 3, kind: input, shape index: {}]
  %s4 = inlined_call_operand.vmem [shape: bf16[64,8], index: 4, kind: input, shape index: {}]
  %s5 = inlined_call_operand.vmem [shape: f32[1,8], index: 5, kind: input, shape index: {}]
  %s6 = inlined_call_operand.vmem [shape: f32[1,768], index: 6, kind: output, shape index: {}]
  %s7 = sld [smem:[#allocation0]]
  $region57: #{edge_type_prediction_forward.1} parent=0
    _
  %s9 = ssub.s32 1, %s7
  %s10 = scalar_select 0, %s9, %s7
  loop: start=0, step=1, limit=4
  $region2: #{edge_type_prediction_forward.1} parent=0 // loop_pre_header
    _
  $region3: #{edge_type_prediction_forward.1} parent=0 // loop_header
    %s12 = sphi 0, %s16
    %p13 = scmp.ge.s32.totalorder %s12, 4
    %s22 = sphi 0, %s24
    %s25 = sphi 0, %s22
    %s26 = sphi 0, %s25
    %s42 = sphi 0, %s26
    %s48 = sphi 0, %s50
    %s51 = sphi 0, %s48
    %s52 = sphi 0, %s51
    %s68 = sphi 0, %s52
    %s72 = sphi 0, %s72
    %s74 = sphi 0, %s72
    %s75 = sphi 0, %s74
    %s89 = sphi 0, %s75
    %s93 = sphi 0, %s93
    %s95 = sphi 0, %s93
    %s96 = sphi 0, %s95
    %s110 = sphi 0, %s96
    %s114 = sphi 0, %s114
    %s116 = sphi 0, %s114
    %s117 = sphi 0, %s116
    %s131 = sphi 0, %s117
    %s135 = sphi 0, %s135
    %s137 = sphi 0, %s135
    %s138 = sphi 0, %s137
    %s152 = sphi 0, %s138
    %s158 = sphi 0, %s160
    %s161 = sphi 0, %s158
    %s162 = sphi 0, %s161
    %s178 = sphi 0, %s162
  $region4: #{edge_type_prediction_forward.1} parent=0 // loop_header_branch
    %15 = sbr.rel (%p13) target = $region8
  $region5: #{edge_type_prediction_forward.1} parent=0 // loop_body
    %s17 = ssub.s32 %s12, 1
    %s18 = ssub.s32 %s12, 2
    %s19 = sadd.s32 %s12, 1
    %s20 = ssub.s32 %s12, %s19
    %p21 = scmp.eq.s32.totalorder %s20, 0
    %s23 = sadd.s32 %s22, 1
    %s24 = scalar_select %p21, %s22, %s23
    %p27 = pneg %p21
    %p28 = scmp.eq.s32.totalorder %s12, 1
    %p29 = por %p27, %p28
    %p30 = scmp.ne.s32.totalorder %s22, %s25
    %p31 = scmp.eq.s32.totalorder %s12, 0
    %p32 = por %p30, %p31
    %p33 = scmp.ne.s32.totalorder %s22, %s25
    %p34 = scmp.eq.s32.totalorder %s17, 1
    %p35 = por %p33, %p34
    %p36 = scmp.ne.s32.totalorder %s25, %s26
    %p37 = scmp.eq.s32.totalorder %s17, 0
    %p38 = por %p36, %p37
    %p39 = scmp.ne.s32.totalorder %s25, %s26
    %p40 = scmp.eq.s32.totalorder %s18, 1
    %p41 = por %p39, %p40
    %p43 = scmp.ne.s32.totalorder %s26, %s42
    %p44 = scmp.eq.s32.totalorder %s18, 0
    %p45 = por %p43, %p44
    %s46 = ssub.s32 %s12, %s19
    %p47 = scmp.eq.s32.totalorder %s46, 0
    %s49 = sadd.s32 %s48, 1
    %s50 = scalar_select %p47, %s48, %s49
    %p53 = pneg %p47
    %p54 = scmp.eq.s32.totalorder %s12, 1
    %p55 = por %p53, %p54
    %p56 = scmp.ne.s32.totalorder %s48, %s51
    %p57 = scmp.eq.s32.totalorder %s12, 0
    %p58 = por %p56, %p57
    %p59 = scmp.ne.s32.totalorder %s48, %s51
    %p60 = scmp.eq.s32.totalorder %s17, 1
    %p61 = por %p59, %p60
    %p62 = scmp.ne.s32.totalorder %s51, %s52
    %p63 = scmp.eq.s32.totalorder %s17, 0
    %p64 = por %p62, %p63
    %p65 = scmp.ne.s32.totalorder %s51, %s52
    %p66 = scmp.eq.s32.totalorder %s18, 1
    %p67 = por %p65, %p66
    %p69 = scmp.ne.s32.totalorder %s52, %s68
    %p70 = scmp.eq.s32.totalorder %s18, 0
    %p71 = por %p69, %p70
    %s73 = sadd.s32 %s72, 1
    %p76 = scmp.eq.s32.totalorder %s12, 1
    %p77 = scmp.ne.s32.totalorder %s72, %s74
    %p78 = scmp.eq.s32.totalorder %s12, 0
    %p79 = por %p77, %p78
    %p80 = scmp.ne.s32.totalorder %s72, %s74
    %p81 = scmp.eq.s32.totalorder %s17, 1
    %p82 = por %p80, %p81
    %p83 = scmp.ne.s32.totalorder %s74, %s75
    %p84 = scmp.eq.s32.totalorder %s17, 0
    %p85 = por %p83, %p84
    %p86 = scmp.ne.s32.totalorder %s74, %s75
    %p87 = scmp.eq.s32.totalorder %s18, 1
    %p88 = por %p86, %p87
    %p90 = scmp.ne.s32.totalorder %s75, %s89
    %p91 = scmp.eq.s32.totalorder %s18, 0
    %p92 = por %p90, %p91
    %s94 = sadd.s32 %s93, 1
    %p97 = scmp.eq.s32.totalorder %s12, 1
    %p98 = scmp.ne.s32.totalorder %s93, %s95
    %p99 = scmp.eq.s32.totalorder %s12, 0
    %p100 = por %p98, %p99
    %p101 = scmp.ne.s32.totalorder %s93, %s95
    %p102 = scmp.eq.s32.totalorder %s17, 1
    %p103 = por %p101, %p102
    %p104 = scmp.ne.s32.totalorder %s95, %s96
    %p105 = scmp.eq.s32.totalorder %s17, 0
    %p106 = por %p104, %p105
    %p107 = scmp.ne.s32.totalorder %s95, %s96
    %p108 = scmp.eq.s32.totalorder %s18, 1
    %p109 = por %p107, %p108
    %p111 = scmp.ne.s32.totalorder %s96, %s110
    %p112 = scmp.eq.s32.totalorder %s18, 0
    %p113 = por %p111, %p112
    %s115 = sadd.s32 %s114, 1
    %p118 = scmp.eq.s32.totalorder %s12, 1
    %p119 = scmp.ne.s32.totalorder %s114, %s116
    %p120 = scmp.eq.s32.totalorder %s12, 0
    %p121 = por %p119, %p120
    %p122 = scmp.ne.s32.totalorder %s114, %s116
    %p123 = scmp.eq.s32.totalorder %s17, 1
    %p124 = por %p122, %p123
    %p125 = scmp.ne.s32.totalorder %s116, %s117
    %p126 = scmp.eq.s32.totalorder %s17, 0
    %p127 = por %p125, %p126
    %p128 = scmp.ne.s32.totalorder %s116, %s117
    %p129 = scmp.eq.s32.totalorder %s18, 1
    %p130 = por %p128, %p129
    %p132 = scmp.ne.s32.totalorder %s117, %s131
    %p133 = scmp.eq.s32.totalorder %s18, 0
    %p134 = por %p132, %p133
    %s136 = sadd.s32 %s135, 1
    %p139 = scmp.eq.s32.totalorder %s12, 1
    %p140 = scmp.ne.s32.totalorder %s135, %s137
    %p141 = scmp.eq.s32.totalorder %s12, 0
    %p142 = por %p140, %p141
    %p143 = scmp.ne.s32.totalorder %s135, %s137
    %p144 = scmp.eq.s32.totalorder %s17, 1
    %p145 = por %p143, %p144
    %p146 = scmp.ne.s32.totalorder %s137, %s138
    %p147 = scmp.eq.s32.totalorder %s17, 0
    %p148 = por %p146, %p147
    %p149 = scmp.ne.s32.totalorder %s137, %s138
    %p150 = scmp.eq.s32.totalorder %s18, 1
    %p151 = por %p149, %p150
    %p153 = scmp.ne.s32.totalorder %s138, %s152
    %p154 = scmp.eq.s32.totalorder %s18, 0
    %p155 = por %p153, %p154
    %s156 = ssub.s32 %s12, %s19
    %p157 = scmp.eq.s32.totalorder %s156, 0
    %s159 = sadd.s32 %s158, 1
    %s160 = scalar_select %p157, %s158, %s159
    %p163 = pneg %p157
    %p164 = scmp.eq.s32.totalorder %s12, 1
    %p165 = por %p163, %p164
    %p166 = scmp.ne.s32.totalorder %s158, %s161
    %p167 = scmp.eq.s32.totalorder %s12, 0
    %p168 = por %p166, %p167
    %p169 = scmp.ne.s32.totalorder %s158, %s161
    %p170 = scmp.eq.s32.totalorder %s17, 1
    %p171 = por %p169, %p170
    %p172 = scmp.ne.s32.totalorder %s161, %s162
    %p173 = scmp.eq.s32.totalorder %s17, 0
    %p174 = por %p172, %p173
    %p175 = scmp.ne.s32.totalorder %s161, %s162
    %p176 = scmp.eq.s32.totalorder %s18, 1
    %p177 = por %p175, %p176
    %p179 = scmp.ne.s32.totalorder %s162, %s178
    %p180 = scmp.eq.s32.totalorder %s18, 0
    %p181 = por %p179, %p180
    %p182 = scmp.le.s32.totalorder 1, %s12
    %p183 = scmp.lt.s32.totalorder %s12, 3
    %p184 = pnand %p182, %p183
    %p185 = pneg %p184
    // Predicated region
    $region9: #{edge_type_prediction_forward.1} parent=5 // pred_check
      _
    $region10: #{edge_type_prediction_forward.1} parent=5 // pred_check_branch
      %187 = sbr.rel (%p184) target = $region12
    $region11: #{edge_type_prediction_forward.1} parent=5 // pred_region
      %s188 = ssub.s32 %s12, 1
      // Predicated region
      $region13: #{edge_type_prediction_forward.1} parent=11 // pred_check
        %p189 = pneg %p85
      $region14: #{edge_type_prediction_forward.1} parent=11 // pred_check_branch
        %191 = sbr.rel (%p189) target = $region16
      $region15: #{edge_type_prediction_forward.1} parent=11 // pred_region
        _
      $region16: #{edge_type_prediction_forward.1} parent=11 // pred_fallthru
        _
      // Predicated region
      $region17: #{edge_type_prediction_forward.1} parent=11 // pred_check
        %p192 = pneg %p106
      $region18: #{edge_type_prediction_forward.1} parent=11 // pred_check_branch
        %194 = sbr.rel (%p192) target = $region20
      $region19: #{edge_type_prediction_forward.1} parent=11 // pred_region
        _
      $region20: #{edge_type_prediction_forward.1} parent=11 // pred_fallthru
        _
      // Predicated region
      $region21: #{edge_type_prediction_forward.1} parent=11 // pred_check
        %p195 = pneg %p127
      $region22: #{edge_type_prediction_forward.1} parent=11 // pred_check_branch
        %197 = sbr.rel (%p195) target = $region24
      $region23: #{edge_type_prediction_forward.1} parent=11 // pred_region
        _
      $region24: #{edge_type_prediction_forward.1} parent=11 // pred_fallthru
        _
      // Predicated region
      $region25: #{edge_type_prediction_forward.1} parent=11 // pred_check
        %p198 = pneg %p148
      $region26: #{edge_type_prediction_forward.1} parent=11 // pred_check_branch
        %200 = sbr.rel (%p198) target = $region28
      $region27: #{edge_type_prediction_forward.1} parent=11 // pred_region
        _
      $region28: #{edge_type_prediction_forward.1} parent=11 // pred_fallthru
        _
    $region12: #{edge_type_prediction_forward.1} parent=5 // pred_fallthru
      _
    %p201 = scmp.lt.s32.totalorder %s12, 2
    // Predicated region
    $region29: #{edge_type_prediction_forward.1} parent=5 // pred_check
      %p202 = pneg %p201
    $region30: #{edge_type_prediction_forward.1} parent=5 // pred_check_branch
      %204 = sbr.rel (%p202) target = $region32
    $region31: #{edge_type_prediction_forward.1} parent=5 // pred_region
      // Predicated region
      $region33: #{edge_type_prediction_forward.1} parent=31 // pred_check
        %p205 = pneg %p32
      $region34: #{edge_type_prediction_forward.1} parent=31 // pred_check_branch
        %207 = sbr.rel (%p205) target = $region36
      $region35: #{edge_type_prediction_forward.1} parent=31 // pred_region
        %s208 = smul.u32 48, %s12
        %p209 = scmp.lt.s32.totalorder %s208, 95
        %s210 = scalar_select %p209, %s208, 95
        %s211 = smul.addr %s210, 4
        %s212 = scalar_lea.vmem %s0, %s211
        %s213 = smul.u32 48, %s12
      $region36: #{edge_type_prediction_forward.1} parent=31 // pred_fallthru
        _
      // Predicated region
      $region37: #{edge_type_prediction_forward.1} parent=31 // pred_check
        %p214 = pneg %p58
      $region38: #{edge_type_prediction_forward.1} parent=31 // pred_check_branch
        %216 = sbr.rel (%p214) target = $region40
      $region39: #{edge_type_prediction_forward.1} parent=31 // pred_region
        %s217 = smul.u32 3, %s12
        %p218 = scmp.lt.s32.totalorder %s217, 5
        %s219 = scalar_select %p218, %s217, 5
        %s220 = scalar_lea.vmem %s1, %s219
        %s221 = smul.u32 3, %s12
      $region40: #{edge_type_prediction_forward.1} parent=31 // pred_fallthru
        _
    $region32: #{edge_type_prediction_forward.1} parent=5 // pred_fallthru
      _
    %p222 = scmp.le.s32.totalorder 1, %s12
    %p223 = scmp.lt.s32.totalorder %s12, 3
    %p224 = pnand %p222, %p223
    %p225 = pneg %p224
    // Predicated region
    $region41: #{edge_type_prediction_forward.1} parent=5 // pred_check
      _
    $region42: #{edge_type_prediction_forward.1} parent=5 // pred_check_branch
      %227 = sbr.rel (%p224) target = $region44
    $region43: #{edge_type_prediction_forward.1} parent=5 // pred_region
      %s228 = ssub.s32 %s12, 1
      %s229 = smul.u32 48, %s17
      %p230 = scmp.lt.s32.totalorder %s229, 95
      %s231 = scalar_select %p230, %s229, 95
      %s232 = smul.addr %s231, 4
      %s233 = scalar_lea.vmem %s0, %s232
      %p234 = pneg %p38
      %p235 = pneg %p35
      %s236 = smul.u32 3, %s17
      %p237 = scmp.lt.s32.totalorder %s236, 5
      %s238 = scalar_select %p237, %s236, 5
      %s239 = scalar_lea.vmem %s1, %s238
      %p240 = pneg %p64
      %p241 = pneg %p61
      %p242 = pneg %p85
      %p243 = pneg %p82
      %p244 = pneg %p106
      %p245 = pneg %p103
      %p246 = pneg %p127
      %p247 = pneg %p124
      %p248 = pneg %p148
      %p249 = pneg %p145
      %p250 = pneg %p174
      %p251 = pneg %p171
      %s252 = smul.u32 3, %s17
      %p253 = scmp.lt.s32.totalorder %s252, 5
      %s254 = scalar_select %p253, %s252, 5
      %s255 = scalar_lea.vmem %s6, %s254
      %s256 = smul.u32 48, %s17
      %p257 = scmp.lt.s32.totalorder %s256, 95
      %s258 = scalar_select %p257, %s256, 95
      %s259 = smul.addr %s258, 4
      %s260 = scalar_lea.vmem %s0, %s259
      %s261 = smul.u32 48, %s17
      %s262 = smul.u32 3, %s17
      %p263 = scmp.lt.s32.totalorder %s262, 5
      %s264 = scalar_select %p263, %s262, 5
      %s265 = scalar_lea.vmem %s1, %s264
      %s266 = smul.u32 3, %s17
      %s267 = smul.u32 3, %s17
      %p268 = scmp.lt.s32.totalorder %s267, 5
      %s269 = scalar_select %p268, %s267, 5
      %s270 = scalar_lea.vmem %s6, %s269
      %s271 = smul.u32 3, %s17
      %v273 = vld [vmem:[%s260] sm:$0xf]
      %v274 = vld [vmem:[%s260 + $0x4] sm:$0xf]
      %v275 = vld [vmem:[%s260 + $0x8] sm:$0xf]
      %v276 = vld [vmem:[%s260 + $0xc] sm:$0xf]
      %v277 = vld [vmem:[%s260 + $0x10] sm:$0xf]
      %v278 = vld [vmem:[%s260 + $0x14] sm:$0xf]
      %v279 = vld [vmem:[%s260 + $0x18] sm:$0xf]
      %v280 = vld [vmem:[%s260 + $0x1c] sm:$0xf]
      %v281 = vld [vmem:[%s260 + $0x20] sm:$0xf]
      %v282 = vld [vmem:[%s260 + $0x24] sm:$0xf]
      %v283 = vld [vmem:[%s260 + $0x28] sm:$0xf]
      %v284 = vld [vmem:[%s260 + $0x2c] sm:$0xf]
      %v285 = vld [vmem:[%s260 + $0x30] sm:$0xf]
      %v286 = vld [vmem:[%s260 + $0x34] sm:$0xf]
      %v287 = vld [vmem:[%s260 + $0x38] sm:$0xf]
      %v288 = vld [vmem:[%s260 + $0x3c] sm:$0xf]
      %v289 = vld [vmem:[%s260 + $0x40] sm:$0xf]
      %v290 = vld [vmem:[%s260 + $0x44] sm:$0xf]
      %v291 = vld [vmem:[%s260 + $0x48] sm:$0xf]
      %v292 = vld [vmem:[%s260 + $0x4c] sm:$0xf]
      %v293 = vld [vmem:[%s260 + $0x50] sm:$0xf]
      %v294 = vld [vmem:[%s260 + $0x54] sm:$0xf]
      %v295 = vld [vmem:[%s260 + $0x58] sm:$0xf]
      %v296 = vld [vmem:[%s260 + $0x5c] sm:$0xf]
      %v297 = vld [vmem:[%s260 + $0x60] sm:$0xf]
      %v298 = vld [vmem:[%s260 + $0x64] sm:$0xf]
      %v299 = vld [vmem:[%s260 + $0x68] sm:$0xf]
      %v300 = vld [vmem:[%s260 + $0x6c] sm:$0xf]
      %v301 = vld [vmem:[%s260 + $0x70] sm:$0xf]
      %v302 = vld [vmem:[%s260 + $0x74] sm:$0xf]
      %v303 = vld [vmem:[%s260 + $0x78] sm:$0xf]
      %v304 = vld [vmem:[%s260 + $0x7c] sm:$0xf]
      %v305 = vld [vmem:[%s260 + $0x80] sm:$0xf]
      %v306 = vld [vmem:[%s260 + $0x84] sm:$0xf]
      %v307 = vld [vmem:[%s260 + $0x88] sm:$0xf]
      %v308 = vld [vmem:[%s260 + $0x8c] sm:$0xf]
      %v309 = vld [vmem:[%s260 + $0x90] sm:$0xf]
      %v310 = vld [vmem:[%s260 + $0x94] sm:$0xf]
      %v311 = vld [vmem:[%s260 + $0x98] sm:$0xf]
      %v312 = vld [vmem:[%s260 + $0x9c] sm:$0xf]
      %v313 = vld [vmem:[%s260 + $0xa0] sm:$0xf]
      %v314 = vld [vmem:[%s260 + $0xa4] sm:$0xf]
      %v315 = vld [vmem:[%s260 + $0xa8] sm:$0xf]
      %v316 = vld [vmem:[%s260 + $0xac] sm:$0xf]
      %v317 = vld [vmem:[%s260 + $0xb0] sm:$0xf]
      %v318 = vld [vmem:[%s260 + $0xb4] sm:$0xf]
      %v319 = vld [vmem:[%s260 + $0xb8] sm:$0xf]
      %v320 = vld [vmem:[%s260 + $0xbc] sm:$0xf]
      %v321 = vld [vmem:[%s2] sm:$0xf]
      %v322 = vld [vmem:[%s2 + $0x4] sm:$0xf]
      %v323 = vld [vmem:[%s2 + $0x8] sm:$0xf]
      %v324 = vld [vmem:[%s2 + $0xc] sm:$0xf]
      %v325 = vld [vmem:[%s2 + $0x10] sm:$0xf]
      %v326 = vld [vmem:[%s2 + $0x14] sm:$0xf]
      %v327 = vld [vmem:[%s2 + $0x18] sm:$0xf]
      %v328 = vld [vmem:[%s2 + $0x1c] sm:$0xf]
      %v329 = vld [vmem:[%s3] sm:$0x1]
      %v331 = vlaneseq
      %v332 = vshrl.u32 %v331, 7
      %v333 = vsub.s32 0, %v332
      %v334 = vrot.slane %v329, %v333
      %v384 = vunpack.c.l.b16 %v273
      %v385 = vunpack.c.l.b16 %v274
      %v386 = vunpack.c.l.b16 %v275
      %v387 = vunpack.c.l.b16 %v276
      %v388 = vunpack.c.l.b16 %v277
      %v389 = vunpack.c.l.b16 %v278
      %v390 = vunpack.c.l.b16 %v279
      %v391 = vunpack.c.l.b16 %v280
      %v392 = vunpack.c.l.b16 %v281
      %v393 = vunpack.c.l.b16 %v282
      %v394 = vunpack.c.l.b16 %v283
      %v395 = vunpack.c.l.b16 %v284
      %v396 = vunpack.c.l.b16 %v285
      %v397 = vunpack.c.l.b16 %v286
      %v398 = vunpack.c.l.b16 %v287
      %v399 = vunpack.c.l.b16 %v288
      %v400 = vunpack.c.l.b16 %v289
      %v401 = vunpack.c.l.b16 %v290
      %v402 = vunpack.c.l.b16 %v291
      %v403 = vunpack.c.l.b16 %v292
      %v404 = vunpack.c.l.b16 %v293
      %v405 = vunpack.c.l.b16 %v294
      %v406 = vunpack.c.l.b16 %v295
      %v407 = vunpack.c.l.b16 %v296
      %v408 = vunpack.c.l.b16 %v297
      %v409 = vunpack.c.l.b16 %v298
      %v410 = vunpack.c.l.b16 %v299
      %v411 = vunpack.c.l.b16 %v300
      %v412 = vunpack.c.l.b16 %v301
      %v413 = vunpack.c.l.b16 %v302
      %v414 = vunpack.c.l.b16 %v303
      %v415 = vunpack.c.l.b16 %v304
      %v416 = vunpack.c.l.b16 %v305
      %v417 = vunpack.c.l.b16 %v306
      %v418 = vunpack.c.l.b16 %v307
      %v419 = vunpack.c.l.b16 %v308
      %v420 = vunpack.c.l.b16 %v309
      %v421 = vunpack.c.l.b16 %v310
      %v422 = vunpack.c.l.b16 %v311
      %v423 = vunpack.c.l.b16 %v312
      %v424 = vunpack.c.l.b16 %v313
      %v425 = vunpack.c.l.b16 %v314
      %v426 = vunpack.c.l.b16 %v315
      %v427 = vunpack.c.l.b16 %v316
      %v428 = vunpack.c.l.b16 %v317
      %v429 = vunpack.c.l.b16 %v318
      %v430 = vunpack.c.l.b16 %v319
      %v431 = vunpack.c.l.b16 %v320
      %v432 = vpack.c.b16 %v385, %v384
      %v433 = vpack.c.b16 %v387, %v386
      %v434 = vpack.c.b16 %v389, %v388
      %v435 = vpack.c.b16 %v391, %v390
      %v436 = vpack.c.b16 %v393, %v392
      %v437 = vpack.c.b16 %v395, %v394
      %v438 = vpack.c.b16 %v397, %v396
      %v439 = vpack.c.b16 %v399, %v398
      %v440 = vpack.c.b16 %v401, %v400
      %v441 = vpack.c.b16 %v403, %v402
      %v442 = vpack.c.b16 %v405, %v404
      %v443 = vpack.c.b16 %v407, %v406
      %v444 = vpack.c.b16 %v409, %v408
      %v445 = vpack.c.b16 %v411, %v410
      %v446 = vpack.c.b16 %v413, %v412
      %v447 = vpack.c.b16 %v415, %v414
      %v448 = vpack.c.b16 %v417, %v416
      %v449 = vpack.c.b16 %v419, %v418
      %v450 = vpack.c.b16 %v421, %v420
      %v451 = vpack.c.b16 %v423, %v422
      %v452 = vpack.c.b16 %v425, %v424
      %v453 = vpack.c.b16 %v427, %v426
      %v454 = vpack.c.b16 %v429, %v428
      %v455 = vpack.c.b16 %v431, %v430
      %v464 = vunpack.c.l.b16 %v321
      %v465 = vunpack.c.l.b16 %v322
      %v466 = vunpack.c.l.b16 %v323
      %v467 = vunpack.c.l.b16 %v324
      %v468 = vunpack.c.l.b16 %v325
      %v469 = vunpack.c.l.b16 %v326
      %v470 = vunpack.c.l.b16 %v327
      %v471 = vunpack.c.l.b16 %v328
      %v472 = vpack.c.b16 %v465, %v464
      %v473 = vpack.c.b16 %v467, %v466
      %v474 = vpack.c.b16 %v469, %v468
      %v475 = vpack.c.b16 %v471, %v470
      %vm480 = vcmask 523264
      %v482 = vsel %vm480, %v432, 0
      %v485 = vsel %vm480, %v433, 0
      %v488 = vsel %vm480, %v434, 0
      %v491 = vsel %vm480, %v435, 0
      %v494 = vsel %vm480, %v436, 0
      %v497 = vsel %vm480, %v437, 0
      %v500 = vsel %vm480, %v438, 0
      %v503 = vsel %vm480, %v439, 0
      %v506 = vsel %vm480, %v440, 0
      %v509 = vsel %vm480, %v441, 0
      %v512 = vsel %vm480, %v442, 0
      %v515 = vsel %vm480, %v443, 0
      %v518 = vsel %vm480, %v444, 0
      %v521 = vsel %vm480, %v445, 0
      %v524 = vsel %vm480, %v446, 0
      %v527 = vsel %vm480, %v447, 0
      %v530 = vsel %vm480, %v448, 0
      %v533 = vsel %vm480, %v449, 0
      %v536 = vsel %vm480, %v450, 0
      %v539 = vsel %vm480, %v451, 0
      %v542 = vsel %vm480, %v452, 0
      %v545 = vsel %vm480, %v453, 0
      %v548 = vsel %vm480, %v454, 0
      %v551 = vsel %vm480, %v455, 0
      %553 = vmatprep.subr.bf16.mxu0 0
      %554 = vmatpush1.bf16.msra.mxu0 %v472
      %555 = vmatprep.subr.bf16.mxu0 0
      %556 = vmatpush1.bf16.msra.mxu0 %v473
      %557 = vmatprep.subr.bf16.mxu0 0
      %558 = vmatpush1.bf16.msra.mxu0 %v474
      %559 = vmatprep.subr.bf16.mxu0 0
      %560 = vmatpush1.bf16.msra.mxu0 %v475
      %561 = vmatprep.subr.bf16.mxu0 0
      %562 = vmatpush1.bf16.msra.mxu0 0
      %563 = vmatprep.subr.bf16.mxu0 0
      %564 = vmatpush1.bf16.msra.mxu0 0
      %565 = vmatprep.subr.bf16.mxu0 0
      %566 = vmatpush1.bf16.msra.mxu0 0
      %567 = vmatprep.subr.bf16.mxu0 0
      %568 = vmatpush1.bf16.msra.mxu0 0
      %569 = vmatprep.subr.bf16.mxu0 0
      %570 = vmatpush1.bf16.msra.mxu0 0
      %571 = vmatprep.subr.bf16.mxu0 0
      %572 = vmatpush1.bf16.msra.mxu0 0
      %573 = vmatprep.subr.bf16.mxu0 0
      %574 = vmatpush1.bf16.msra.mxu0 0
      %575 = vmatprep.subr.bf16.mxu0 0
      %576 = vmatpush1.bf16.msra.mxu0 0
      %577 = vmatprep.subr.bf16.mxu0 0
      %578 = vmatpush1.bf16.msra.mxu0 0
      %579 = vmatprep.subr.bf16.mxu0 0
      %580 = vmatpush1.bf16.msra.mxu0 0
      %581 = vmatprep.subr.bf16.mxu0 0
      %582 = vmatpush1.bf16.msra.mxu0 0
      %583 = vmatprep.subr.bf16.mxu0 0
      %584 = vmatpush1.bf16.msra.mxu0 0
      %585 = vmatprep.mubr.bf16.mxu0 0
      %586 = vmatmul.mubr.bf16.gmra.mrb[0].mxu0 %v482
      %v587 = vpop.f32.mrb[0].mxu0
      %v588 = vadd.f32 %v334, %v587
      %v589 = vpop.f32.mrb[0].mxu0
      %v590 = vpop.f32.mrb[0].mxu0
      %v591 = vadd.f32 %v334, %v590
      %v592 = vpop.f32.mrb[0].mxu0
      %593 = vmatprep.mubr.bf16.mxu0 0
      %594 = vmatmul.mubr.bf16.gmra.mrb[0].mxu0 %v485
      %v595 = vpop.f32.mrb[0].mxu0
      %v596 = vadd.f32 %v334, %v595
      %v597 = vpop.f32.mrb[0].mxu0
      %v598 = vpop.f32.mrb[0].mxu0
      %v599 = vadd.f32 %v334, %v598
      %v600 = vpop.f32.mrb[0].mxu0
      %601 = vmatprep.mubr.bf16.mxu0 0
      %602 = vmatmul.mubr.bf16.gmra.mrb[0].mxu0 %v488
      %v603 = vpop.f32.mrb[0].mxu0
      %v604 = vadd.f32 %v334, %v603
      %v605 = vpop.f32.mrb[0].mxu0
      %v606 = vpop.f32.mrb[0].mxu0
      %v607 = vadd.f32 %v334, %v606
      %v608 = vpop.f32.mrb[0].mxu0
      %609 = vmatprep.mubr.bf16.mxu0 0
      %610 = vmatmul.mubr.bf16.gmra.mrb[0].mxu0 %v491
      %v611 = vpop.f32.mrb[0].mxu0
      %v612 = vadd.f32 %v334, %v611
      %v613 = vpop.f32.mrb[0].mxu0
      %v614 = vpop.f32.mrb[0].mxu0
      %v615 = vadd.f32 %v334, %v614
      %v616 = vpop.f32.mrb[0].mxu0
      %617 = vmatprep.mubr.bf16.mxu0 0
      %618 = vmatmul.mubr.bf16.gmra.mrb[0].mxu0 %v494
      %v619 = vpop.f32.mrb[0].mxu0
      %v620 = vadd.f32 %v334, %v619
      %v621 = vpop.f32.mrb[0].mxu0
      %v622 = vpop.f32.mrb[0].mxu0
      %v623 = vadd.f32 %v334, %v622
      %v624 = vpop.f32.mrb[0].mxu0
      %625 = vmatprep.mubr.bf16.mxu0 0
      %626 = vmatmul.mubr.bf16.gmra.mrb[0].mxu0 %v497
      %v627 = vpop.f32.mrb[0].mxu0
      %v628 = vadd.f32 %v334, %v627
      %v629 = vpop.f32.mrb[0].mxu0
      %v630 = vpop.f32.mrb[0].mxu0
      %v631 = vadd.f32 %v334, %v630
      %v632 = vpop.f32.mrb[0].mxu0
      %633 = vmatprep.mubr.bf16.mxu0 0
      %634 = vmatmul.mubr.bf16.gmra.mrb[0].mxu0 %v500
      %v635 = vpop.f32.mrb[0].mxu0
      %v636 = vadd.f32 %v334, %v635
      %v637 = vpop.f32.mrb[0].mxu0
      %v638 = vpop.f32.mrb[0].mxu0
      %v639 = vadd.f32 %v334, %v638
      %v640 = vpop.f32.mrb[0].mxu0
      %641 = vmatprep.mubr.bf16.mxu0 0
      %642 = vmatmul.mubr.bf16.gmra.mrb[0].mxu0 %v503
      %v643 = vpop.f32.mrb[0].mxu0
      %v644 = vadd.f32 %v334, %v643
      %v645 = vpop.f32.mrb[0].mxu0
      %v646 = vpop.f32.mrb[0].mxu0
      %v647 = vadd.f32 %v334, %v646
      %v648 = vpop.f32.mrb[0].mxu0
      %649 = vmatprep.mubr.bf16.mxu0 0
      %650 = vmatmul.mubr.bf16.gmra.mrb[0].mxu0 %v506
      %v651 = vpop.f32.mrb[0].mxu0
      %v652 = vadd.f32 %v334, %v651
      %v653 = vpop.f32.mrb[0].mxu0
      %v654 = vpop.f32.mrb[0].mxu0
      %v655 = vadd.f32 %v334, %v654
      %v656 = vpop.f32.mrb[0].mxu0
      %657 = vmatprep.mubr.bf16.mxu0 0
      %658 = vmatmul.mubr.bf16.gmra.mrb[0].mxu0 %v509
      %v659 = vpop.f32.mrb[0].mxu0
      %v660 = vadd.f32 %v334, %v659
      %v661 = vpop.f32.mrb[0].mxu0
      %v662 = vpop.f32.mrb[0].mxu0
      %v663 = vadd.f32 %v334, %v662
      %v664 = vpop.f32.mrb[0].mxu0
      %665 = vmatprep.mubr.bf16.mxu0 0
      %666 = vmatmul.mubr.bf16.gmra.mrb[0].mxu0 %v512
      %v667 = vpop.f32.mrb[0].mxu0
      %v668 = vadd.f32 %v334, %v667
      %v669 = vpop.f32.mrb[0].mxu0
      %v670 = vpop.f32.mrb[0].mxu0
      %v671 = vadd.f32 %v334, %v670
      %v672 = vpop.f32.mrb[0].mxu0
      %673 = vmatprep.mubr.bf16.mxu0 0
      %674 = vmatmul.mubr.bf16.gmra.mrb[0].mxu0 %v515
      %v675 = vpop.f32.mrb[0].mxu0
      %v676 = vadd.f32 %v334, %v675
      %v677 = vpop.f32.mrb[0].mxu0
      %v678 = vpop.f32.mrb[0].mxu0
      %v679 = vadd.f32 %v334, %v678
      %v680 = vpop.f32.mrb[0].mxu0
      %681 = vmatprep.mubr.bf16.mxu0 0
      %682 = vmatmul.mubr.bf16.gmra.mrb[0].mxu0 %v518
      %v683 = vpop.f32.mrb[0].mxu0
      %v684 = vadd.f32 %v334, %v683
      %v685 = vpop.f32.mrb[0].mxu0
      %v686 = vpop.f32.mrb[0].mxu0
      %v687 = vadd.f32 %v334, %v686
      %v688 = vpop.f32.mrb[0].mxu0
      %689 = vmatprep.mubr.bf16.mxu0 0
      %690 = vmatmul.mubr.bf16.gmra.mrb[0].mxu0 %v521
      %v691 = vpop.f32.mrb[0].mxu0
      %v692 = vadd.f32 %v334, %v691
      %v693 = vpop.f32.mrb[0].mxu0
      %v694 = vpop.f32.mrb[0].mxu0
      %v695 = vadd.f32 %v334, %v694
      %v696 = vpop.f32.mrb[0].mxu0
      %697 = vmatprep.mubr.bf16.mxu0 0
      %698 = vmatmul.mubr.bf16.gmra.mrb[0].mxu0 %v524
      %v699 = vpop.f32.mrb[0].mxu0
      %v700 = vadd.f32 %v334, %v699
      %v701 = vpop.f32.mrb[0].mxu0
      %v702 = vpop.f32.mrb[0].mxu0
      %v703 = vadd.f32 %v334, %v702
      %v704 = vpop.f32.mrb[0].mxu0
      %705 = vmatprep.mubr.bf16.mxu0 0
      %706 = vmatmul.mubr.bf16.gmra.mrb[0].mxu0 %v527
      %v707 = vpop.f32.mrb[0].mxu0
      %v708 = vadd.f32 %v334, %v707
      %v709 = vpop.f32.mrb[0].mxu0
      %v710 = vpop.f32.mrb[0].mxu0
      %v711 = vadd.f32 %v334, %v710
      %v712 = vpop.f32.mrb[0].mxu0
      %713 = vmatprep.mubr.bf16.mxu0 0
      %714 = vmatmul.mubr.bf16.gmra.mrb[0].mxu0 %v530
      %v715 = vpop.f32.mrb[0].mxu0
      %v716 = vadd.f32 %v334, %v715
      %v717 = vpop.f32.mrb[0].mxu0
      %v718 = vpop.f32.mrb[0].mxu0
      %v719 = vadd.f32 %v334, %v718
      %v720 = vpop.f32.mrb[0].mxu0
      %721 = vmatprep.mubr.bf16.mxu0 0
      %722 = vmatmul.mubr.bf16.gmra.mrb[0].mxu0 %v533
      %v723 = vpop.f32.mrb[0].mxu0
      %v724 = vadd.f32 %v334, %v723
      %v725 = vpop.f32.mrb[0].mxu0
      %v726 = vpop.f32.mrb[0].mxu0
      %v727 = vadd.f32 %v334, %v726
      %v728 = vpop.f32.mrb[0].mxu0
      %729 = vmatprep.mubr.bf16.mxu0 0
      %730 = vmatmul.mubr.bf16.gmra.mrb[0].mxu0 %v536
      %v731 = vpop.f32.mrb[0].mxu0
      %v732 = vadd.f32 %v334, %v731
      %v733 = vpop.f32.mrb[0].mxu0
      %v734 = vpop.f32.mrb[0].mxu0
      %v735 = vadd.f32 %v334, %v734
      %v736 = vpop.f32.mrb[0].mxu0
      %737 = vmatprep.mubr.bf16.mxu0 0
      %738 = vmatmul.mubr.bf16.gmra.mrb[0].mxu0 %v539
      %v739 = vpop.f32.mrb[0].mxu0
      %v740 = vadd.f32 %v334, %v739
      %v741 = vpop.f32.mrb[0].mxu0
      %v742 = vpop.f32.mrb[0].mxu0
      %v743 = vadd.f32 %v334, %v742
      %v744 = vpop.f32.mrb[0].mxu0
      %745 = vmatprep.mubr.bf16.mxu0 0
      %746 = vmatmul.mubr.bf16.gmra.mrb[0].mxu0 %v542
      %v747 = vpop.f32.mrb[0].mxu0
      %v748 = vadd.f32 %v334, %v747
      %v749 = vpop.f32.mrb[0].mxu0
      %v750 = vpop.f32.mrb[0].mxu0
      %v751 = vadd.f32 %v334, %v750
      %v752 = vpop.f32.mrb[0].mxu0
      %753 = vmatprep.mubr.bf16.mxu0 0
      %754 = vmatmul.mubr.bf16.gmra.mrb[0].mxu0 %v545
      %v755 = vpop.f32.mrb[0].mxu0
      %v756 = vadd.f32 %v334, %v755
      %v757 = vpop.f32.mrb[0].mxu0
      %v758 = vpop.f32.mrb[0].mxu0
      %v759 = vadd.f32 %v334, %v758
      %v760 = vpop.f32.mrb[0].mxu0
      %761 = vmatprep.mubr.bf16.mxu0 0
      %762 = vmatmul.mubr.bf16.gmra.mrb[0].mxu0 %v548
      %v763 = vpop.f32.mrb[0].mxu0
      %v764 = vadd.f32 %v334, %v763
      %v765 = vpop.f32.mrb[0].mxu0
      %v766 = vpop.f32.mrb[0].mxu0
      %v767 = vadd.f32 %v334, %v766
      %v768 = vpop.f32.mrb[0].mxu0
      %769 = vmatprep.mubr.bf16.mxu0 0
      %770 = vmatmul.mubr.bf16.gmra.mrb[0].mxu0 %v551
      %v771 = vpop.f32.mrb[0].mxu0
      %v772 = vadd.f32 %v334, %v771
      %v773 = vpop.f32.mrb[0].mxu0
      %v774 = vpop.f32.mrb[0].mxu0
      %v775 = vadd.f32 %v334, %v774
      %v776 = vpop.f32.mrb[0].mxu0
      %777 = vdwg.mxu0
      %v778 = vmax.f32 %v588, 0.0
      %v779 = vmax.f32 %v591, 0.0
      %v780 = vmax.f32 %v596, 0.0
      %v781 = vmax.f32 %v599, 0.0
      %v782 = vmax.f32 %v604, 0.0
      %v783 = vmax.f32 %v607, 0.0
      %v784 = vmax.f32 %v612, 0.0
      %v785 = vmax.f32 %v615, 0.0
      %v786 = vmax.f32 %v620, 0.0
      %v787 = vmax.f32 %v623, 0.0
      %v788 = vmax.f32 %v628, 0.0
      %v789 = vmax.f32 %v631, 0.0
      %v790 = vmax.f32 %v636, 0.0
      %v791 = vmax.f32 %v639, 0.0
      %v792 = vmax.f32 %v644, 0.0
      %v793 = vmax.f32 %v647, 0.0
      %v794 = vmax.f32 %v652, 0.0
      %v795 = vmax.f32 %v655, 0.0
      %v796 = vmax.f32 %v660, 0.0
      %v797 = vmax.f32 %v663, 0.0
      %v798 = vmax.f32 %v668, 0.0
      %v799 = vmax.f32 %v671, 0.0
      %v800 = vmax.f32 %v676, 0.0
      %v801 = vmax.f32 %v679, 0.0
      %v802 = vmax.f32 %v684, 0.0
      %v803 = vmax.f32 %v687, 0.0
      %v804 = vmax.f32 %v692, 0.0
      %v805 = vmax.f32 %v695, 0.0
      %v806 = vmax.f32 %v700, 0.0
      %v807 = vmax.f32 %v703, 0.0
      %v808 = vmax.f32 %v708, 0.0
      %v809 = vmax.f32 %v711, 0.0
      %v810 = vmax.f32 %v716, 0.0
      %v811 = vmax.f32 %v719, 0.0
      %v812 = vmax.f32 %v724, 0.0
      %v813 = vmax.f32 %v727, 0.0
      %v814 = vmax.f32 %v732, 0.0
      %v815 = vmax.f32 %v735, 0.0
      %v816 = vmax.f32 %v740, 0.0
      %v817 = vmax.f32 %v743, 0.0
      %v818 = vmax.f32 %v748, 0.0
      %v819 = vmax.f32 %v751, 0.0
      %v820 = vmax.f32 %v756, 0.0
      %v821 = vmax.f32 %v759, 0.0
      %v822 = vmax.f32 %v764, 0.0
      %v823 = vmax.f32 %v767, 0.0
      %v824 = vmax.f32 %v772, 0.0
      %v825 = vmax.f32 %v775, 0.0
      %v826 = vpack.c.bf16 %v779, %v778
      %v827 = vpack.c.bf16 %v781, %v780
      %v828 = vpack.c.bf16 %v783, %v782
      %v829 = vpack.c.bf16 %v785, %v784
      %v830 = vpack.c.bf16 %v787, %v786
      %v831 = vpack.c.bf16 %v789, %v788
      %v832 = vpack.c.bf16 %v791, %v790
      %v833 = vpack.c.bf16 %v793, %v792
      %v834 = vpack.c.bf16 %v795, %v794
      %v835 = vpack.c.bf16 %v797, %v796
      %v836 = vpack.c.bf16 %v799, %v798
      %v837 = vpack.c.bf16 %v801, %v800
      %v838 = vpack.c.bf16 %v803, %v802
      %v839 = vpack.c.bf16 %v805, %v804
      %v840 = vpack.c.bf16 %v807, %v806
      %v841 = vpack.c.bf16 %v809, %v808
      %v842 = vpack.c.bf16 %v811, %v810
      %v843 = vpack.c.bf16 %v813, %v812
      %v844 = vpack.c.bf16 %v815, %v814
      %v845 = vpack.c.bf16 %v817, %v816
      %v846 = vpack.c.bf16 %v819, %v818
      %v847 = vpack.c.bf16 %v821, %v820
      %v848 = vpack.c.bf16 %v823, %v822
      %v849 = vpack.c.bf16 %v825, %v824
      %v850 = vld [vmem:[%s4] sm:$0xf]
      %v851 = vld [vmem:[%s4 + $0x4] sm:$0xf]
      %v852 = vld [vmem:[%s4 + $0x8] sm:$0xf]
      %v853 = vld [vmem:[%s4 + $0xc] sm:$0xf]
      %v854 = vld [vmem:[%s4 + $0x10] sm:$0xf]
      %v855 = vld [vmem:[%s4 + $0x14] sm:$0xf]
      %v856 = vld [vmem:[%s4 + $0x18] sm:$0xf]
      %v857 = vld [vmem:[%s4 + $0x1c] sm:$0xf]
      %v858 = vld [vmem:[%s5] sm:$0x1]
      %v860 = vlaneseq
      %v861 = vshrl.u32 %v860, 7
      %v862 = vsub.s32 0, %v861
      %v863 = vrot.slane %v858, %v862
      %v873 = vunpack.c.l.b16 %v850
      %v874 = vunpack.c.l.b16 %v851
      %v875 = vunpack.c.l.b16 %v852
      %v876 = vunpack.c.l.b16 %v853
      %v877 = vunpack.c.l.b16 %v854
      %v878 = vunpack.c.l.b16 %v855
      %v879 = vunpack.c.l.b16 %v856
      %v880 = vunpack.c.l.b16 %v857
      %v881 = vpack.c.b16 %v874, %v873
      %v882 = vpack.c.b16 %v876, %v875
      %v883 = vpack.c.b16 %v878, %v877
      %v884 = vpack.c.b16 %v880, %v879
      %v890 = vsel %vm480, %v826, 0
      %v893 = vsel %vm480, %v827, 0
      %v896 = vsel %vm480, %v828, 0
      %v899 = vsel %vm480, %v829, 0
      %v902 = vsel %vm480, %v830, 0
      %v905 = vsel %vm480, %v831, 0
      %v908 = vsel %vm480, %v832, 0
      %v911 = vsel %vm480, %v833, 0
      %v914 = vsel %vm480, %v834, 0
      %v917 = vsel %vm480, %v835, 0
      %v920 = vsel %vm480, %v836, 0
      %v923 = vsel %vm480, %v837, 0
      %v926 = vsel %vm480, %v838, 0
      %v929 = vsel %vm480, %v839, 0
      %v932 = vsel %vm480, %v840, 0
      %v935 = vsel %vm480, %v841, 0
      %v938 = vsel %vm480, %v842, 0
      %v941 = vsel %vm480, %v843, 0
      %v944 = vsel %vm480, %v844, 0
      %v947 = vsel %vm480, %v845, 0
      %v950 = vsel %vm480, %v846, 0
      %v953 = vsel %vm480, %v847, 0
      %v956 = vsel %vm480, %v848, 0
      %v959 = vsel %vm480, %v849, 0
      %961 = vmatprep.subr.bf16.mxu0 0
      %962 = vmatpush1.bf16.msra.mxu0 %v881
      %963 = vmatprep.subr.bf16.mxu0 0
      %964 = vmatpush1.bf16.msra.mxu0 %v882
      %965 = vmatprep.subr.bf16.mxu0 0
      %966 = vmatpush1.bf16.msra.mxu0 %v883
      %967 = vmatprep.subr.bf16.mxu0 0
      %968 = vmatpush1.bf16.msra.mxu0 %v884
      %969 = vmatprep.subr.bf16.mxu0 0
      %970 = vmatpush1.bf16.msra.mxu0 0
      %971 = vmatprep.subr.bf16.mxu0 0
      %972 = vmatpush1.bf16.msra.mxu0 0
      %973 = vmatprep.subr.bf16.mxu0 0
      %974 = vmatpush1.bf16.msra.mxu0 0
      %975 = vmatprep.subr.bf16.mxu0 0
      %976 = vmatpush1.bf16.msra.mxu0 0
      %977 = vmatprep.subr.bf16.mxu0 0
      %978 = vmatpush1.bf16.msra.mxu0 0
      %979 = vmatprep.subr.bf16.mxu0 0
      %980 = vmatpush1.bf16.msra.mxu0 0
      %981 = vmatprep.subr.bf16.mxu0 0
      %982 = vmatpush1.bf16.msra.mxu0 0
      %983 = vmatprep.subr.bf16.mxu0 0
      %984 = vmatpush1.bf16.msra.mxu0 0
      %985 = vmatprep.subr.bf16.mxu0 0
      %986 = vmatpush1.bf16.msra.mxu0 0
      %987 = vmatprep.subr.bf16.mxu0 0
      %988 = vmatpush1.bf16.msra.mxu0 0
      %989 = vmatprep.subr.bf16.mxu0 0
      %990 = vmatpush1.bf16.msra.mxu0 0
      %991 = vmatprep.subr.bf16.mxu0 0
      %992 = vmatpush1.bf16.msra.mxu0 0
      %993 = vmatprep.mubr.bf16.mxu0 0
      %994 = vmatmul.mubr.bf16.gmra.mrb[0].mxu0 %v890
      %v995 = vpop.f32.mrb[0].mxu0
      %v996 = vadd.f32 %v863, %v995
      %v997 = vpop.f32.mrb[0].mxu0
      %v998 = vpop.f32.mrb[0].mxu0
      %v999 = vadd.f32 %v863, %v998
      %v1000 = vpop.f32.mrb[0].mxu0
      %1001 = vmatprep.mubr.bf16.mxu0 0
      %1002 = vmatmul.mubr.bf16.gmra.mrb[0].mxu0 %v893
      %v1003 = vpop.f32.mrb[0].mxu0
      %v1004 = vadd.f32 %v863, %v1003
      %v1005 = vpop.f32.mrb[0].mxu0
      %v1006 = vpop.f32.mrb[0].mxu0
      %v1007 = vadd.f32 %v863, %v1006
      %v1008 = vpop.f32.mrb[0].mxu0
      %1009 = vmatprep.mubr.bf16.mxu0 0
      %1010 = vmatmul.mubr.bf16.gmra.mrb[0].mxu0 %v896
      %v1011 = vpop.f32.mrb[0].mxu0
      %v1012 = vadd.f32 %v863, %v1011
      %v1013 = vpop.f32.mrb[0].mxu0
      %v1014 = vpop.f32.mrb[0].mxu0
      %v1015 = vadd.f32 %v863, %v1014
      %v1016 = vpop.f32.mrb[0].mxu0
      %1017 = vmatprep.mubr.bf16.mxu0 0
      %1018 = vmatmul.mubr.bf16.gmra.mrb[0].mxu0 %v899
      %v1019 = vpop.f32.mrb[0].mxu0
      %v1020 = vadd.f32 %v863, %v1019
      %v1021 = vpop.f32.mrb[0].mxu0
      %v1022 = vpop.f32.mrb[0].mxu0
      %v1023 = vadd.f32 %v863, %v1022
      %v1024 = vpop.f32.mrb[0].mxu0
      %1025 = vmatprep.mubr.bf16.mxu0 0
      %1026 = vmatmul.mubr.bf16.gmra.mrb[0].mxu0 %v902
      %v1027 = vpop.f32.mrb[0].mxu0
      %v1028 = vadd.f32 %v863, %v1027
      %v1029 = vpop.f32.mrb[0].mxu0
      %v1030 = vpop.f32.mrb[0].mxu0
      %v1031 = vadd.f32 %v863, %v1030
      %v1032 = vpop.f32.mrb[0].mxu0
      %1033 = vmatprep.mubr.bf16.mxu0 0
      %1034 = vmatmul.mubr.bf16.gmra.mrb[0].mxu0 %v905
      %v1035 = vpop.f32.mrb[0].mxu0
      %v1036 = vadd.f32 %v863, %v1035
      %v1037 = vpop.f32.mrb[0].mxu0
      %v1038 = vpop.f32.mrb[0].mxu0
      %v1039 = vadd.f32 %v863, %v1038
      %v1040 = vpop.f32.mrb[0].mxu0
      %1041 = vmatprep.mubr.bf16.mxu0 0
      %1042 = vmatmul.mubr.bf16.gmra.mrb[0].mxu0 %v908
      %v1043 = vpop.f32.mrb[0].mxu0
      %v1044 = vadd.f32 %v863, %v1043
      %v1045 = vpop.f32.mrb[0].mxu0
      %v1046 = vpop.f32.mrb[0].mxu0
      %v1047 = vadd.f32 %v863, %v1046
      %v1048 = vpop.f32.mrb[0].mxu0
      %1049 = vmatprep.mubr.bf16.mxu0 0
      %1050 = vmatmul.mubr.bf16.gmra.mrb[0].mxu0 %v911
      %v1051 = vpop.f32.mrb[0].mxu0
      %v1052 = vadd.f32 %v863, %v1051
      %v1053 = vpop.f32.mrb[0].mxu0
      %v1054 = vpop.f32.mrb[0].mxu0
      %v1055 = vadd.f32 %v863, %v1054
      %v1056 = vpop.f32.mrb[0].mxu0
      %1057 = vmatprep.mubr.bf16.mxu0 0
      %1058 = vmatmul.mubr.bf16.gmra.mrb[0].mxu0 %v914
      %v1059 = vpop.f32.mrb[0].mxu0
      %v1060 = vadd.f32 %v863, %v1059
      %v1061 = vpop.f32.mrb[0].mxu0
      %v1062 = vpop.f32.mrb[0].mxu0
      %v1063 = vadd.f32 %v863, %v1062
      %v1064 = vpop.f32.mrb[0].mxu0
      %1065 = vmatprep.mubr.bf16.mxu0 0
      %1066 = vmatmul.mubr.bf16.gmra.mrb[0].mxu0 %v917
      %v1067 = vpop.f32.mrb[0].mxu0
      %v1068 = vadd.f32 %v863, %v1067
      %v1069 = vpop.f32.mrb[0].mxu0
      %v1070 = vpop.f32.mrb[0].mxu0
      %v1071 = vadd.f32 %v863, %v1070
      %v1072 = vpop.f32.mrb[0].mxu0
      %1073 = vmatprep.mubr.bf16.mxu0 0
      %1074 = vmatmul.mubr.bf16.gmra.mrb[0].mxu0 %v920
      %v1075 = vpop.f32.mrb[0].mxu0
      %v1076 = vadd.f32 %v863, %v1075
      %v1077 = vpop.f32.mrb[0].mxu0
      %v1078 = vpop.f32.mrb[0].mxu0
      %v1079 = vadd.f32 %v863, %v1078
      %v1080 = vpop.f32.mrb[0].mxu0
      %1081 = vmatprep.mubr.bf16.mxu0 0
      %1082 = vmatmul.mubr.bf16.gmra.mrb[0].mxu0 %v923
      %v1083 = vpop.f32.mrb[0].mxu0
      %v1084 = vadd.f32 %v863, %v1083
      %v1085 = vpop.f32.mrb[0].mxu0
      %v1086 = vpop.f32.mrb[0].mxu0
      %v1087 = vadd.f32 %v863, %v1086
      %v1088 = vpop.f32.mrb[0].mxu0
      %1089 = vmatprep.mubr.bf16.mxu0 0
      %1090 = vmatmul.mubr.bf16.gmra.mrb[0].mxu0 %v926
      %v1091 = vpop.f32.mrb[0].mxu0
      %v1092 = vadd.f32 %v863, %v1091
      %v1093 = vpop.f32.mrb[0].mxu0
      %v1094 = vpop.f32.mrb[0].mxu0
      %v1095 = vadd.f32 %v863, %v1094
      %v1096 = vpop.f32.mrb[0].mxu0
      %1097 = vmatprep.mubr.bf16.mxu0 0
      %1098 = vmatmul.mubr.bf16.gmra.mrb[0].mxu0 %v929
      %v1099 = vpop.f32.mrb[0].mxu0
      %v1100 = vadd.f32 %v863, %v1099
      %v1101 = vpop.f32.mrb[0].mxu0
      %v1102 = vpop.f32.mrb[0].mxu0
      %v1103 = vadd.f32 %v863, %v1102
      %v1104 = vpop.f32.mrb[0].mxu0
      %1105 = vmatprep.mubr.bf16.mxu0 0
      %1106 = vmatmul.mubr.bf16.gmra.mrb[0].mxu0 %v932
      %v1107 = vpop.f32.mrb[0].mxu0
      %v1108 = vadd.f32 %v863, %v1107
      %v1109 = vpop.f32.mrb[0].mxu0
      %v1110 = vpop.f32.mrb[0].mxu0
      %v1111 = vadd.f32 %v863, %v1110
      %v1112 = vpop.f32.mrb[0].mxu0
      %1113 = vmatprep.mubr.bf16.mxu0 0
      %1114 = vmatmul.mubr.bf16.gmra.mrb[0].mxu0 %v935
      %v1115 = vpop.f32.mrb[0].mxu0
      %v1116 = vadd.f32 %v863, %v1115
      %v1117 = vpop.f32.mrb[0].mxu0
      %v1118 = vpop.f32.mrb[0].mxu0
      %v1119 = vadd.f32 %v863, %v1118
      %v1120 = vpop.f32.mrb[0].mxu0
      %1121 = vmatprep.mubr.bf16.mxu0 0
      %1122 = vmatmul.mubr.bf16.gmra.mrb[0].mxu0 %v938
      %v1123 = vpop.f32.mrb[0].mxu0
      %v1124 = vadd.f32 %v863, %v1123
      %v1125 = vpop.f32.mrb[0].mxu0
      %v1126 = vpop.f32.mrb[0].mxu0
      %v1127 = vadd.f32 %v863, %v1126
      %v1128 = vpop.f32.mrb[0].mxu0
      %1129 = vmatprep.mubr.bf16.mxu0 0
      %1130 = vmatmul.mubr.bf16.gmra.mrb[0].mxu0 %v941
      %v1131 = vpop.f32.mrb[0].mxu0
      %v1132 = vadd.f32 %v863, %v1131
      %v1133 = vpop.f32.mrb[0].mxu0
      %v1134 = vpop.f32.mrb[0].mxu0
      %v1135 = vadd.f32 %v863, %v1134
      %v1136 = vpop.f32.mrb[0].mxu0
      %1137 = vmatprep.mubr.bf16.mxu0 0
      %1138 = vmatmul.mubr.bf16.gmra.mrb[0].mxu0 %v944
      %v1139 = vpop.f32.mrb[0].mxu0
      %v1140 = vadd.f32 %v863, %v1139
      %v1141 = vpop.f32.mrb[0].mxu0
      %v1142 = vpop.f32.mrb[0].mxu0
      %v1143 = vadd.f32 %v863, %v1142
      %v1144 = vpop.f32.mrb[0].mxu0
      %1145 = vmatprep.mubr.bf16.mxu0 0
      %1146 = vmatmul.mubr.bf16.gmra.mrb[0].mxu0 %v947
      %v1147 = vpop.f32.mrb[0].mxu0
      %v1148 = vadd.f32 %v863, %v1147
      %v1149 = vpop.f32.mrb[0].mxu0
      %v1150 = vpop.f32.mrb[0].mxu0
      %v1151 = vadd.f32 %v863, %v1150
      %v1152 = vpop.f32.mrb[0].mxu0
      %1153 = vmatprep.mubr.bf16.mxu0 0
      %1154 = vmatmul.mubr.bf16.gmra.mrb[0].mxu0 %v950
      %v1155 = vpop.f32.mrb[0].mxu0
      %v1156 = vadd.f32 %v863, %v1155
      %v1157 = vpop.f32.mrb[0].mxu0
      %v1158 = vpop.f32.mrb[0].mxu0
      %v1159 = vadd.f32 %v863, %v1158
      %v1160 = vpop.f32.mrb[0].mxu0
      %1161 = vmatprep.mubr.bf16.mxu0 0
      %1162 = vmatmul.mubr.bf16.gmra.mrb[0].mxu0 %v953
      %v1163 = vpop.f32.mrb[0].mxu0
      %v1164 = vadd.f32 %v863, %v1163
      %v1165 = vpop.f32.mrb[0].mxu0
      %v1166 = vpop.f32.mrb[0].mxu0
      %v1167 = vadd.f32 %v863, %v1166
      %v1168 = vpop.f32.mrb[0].mxu0
      %1169 = vmatprep.mubr.bf16.mxu0 0
      %1170 = vmatmul.mubr.bf16.gmra.mrb[0].mxu0 %v956
      %v1171 = vpop.f32.mrb[0].mxu0
      %v1172 = vadd.f32 %v863, %v1171
      %v1173 = vpop.f32.mrb[0].mxu0
      %v1174 = vpop.f32.mrb[0].mxu0
      %v1175 = vadd.f32 %v863, %v1174
      %v1176 = vpop.f32.mrb[0].mxu0
      %1177 = vmatprep.mubr.bf16.mxu0 0
      %1178 = vmatmul.mubr.bf16.gmra.mrb[0].mxu0 %v959
      %v1179 = vpop.f32.mrb[0].mxu0
      %v1180 = vadd.f32 %v863, %v1179
      %v1181 = vpop.f32.mrb[0].mxu0
      %v1182 = vpop.f32.mrb[0].mxu0
      %v1183 = vadd.f32 %v863, %v1182
      %v1184 = vpop.f32.mrb[0].mxu0
      %1185 = vdwg.mxu0
      %1186 = vxpose.xlu0.b32.start [1/16] %v996, 128
      %1187 = vxpose.xlu0.b32.cont [2/16] %v999, 128
      %1188 = vxpose.xlu0.b32.cont [3/16] %v1004, 128
      %1189 = vxpose.xlu0.b32.cont [4/16] %v1007, 128
      %1190 = vxpose.xlu0.b32.cont [5/16] %v1012, 128
      %1191 = vxpose.xlu0.b32.cont [6/16] %v1015, 128
      %1192 = vxpose.xlu0.b32.cont [7/16] %v1020, 128
      %1193 = vxpose.xlu0.b32.cont [8/16] %v1023, 128
      %1194 = vxpose.xlu0.b32.cont [9/16] %v1028, 128
      %1195 = vxpose.xlu0.b32.cont [10/16] %v1031, 128
      %1196 = vxpose.xlu0.b32.cont [11/16] %v1036, 128
      %1197 = vxpose.xlu0.b32.cont [12/16] %v1039, 128
      %1198 = vxpose.xlu0.b32.cont [13/16] %v1044, 128
      %1199 = vxpose.xlu0.b32.cont [14/16] %v1047, 128
      %1200 = vxpose.xlu0.b32.cont [15/16] %v1052, 128
      %1201 = vxpose.xlu0.b32.end [16/16] %v1055, 128
      %v1202 = vpop.trf.xlu0
      %v1203 = vpop.trf.xlu0
      %v1204 = vpop.trf.xlu0
      %v1205 = vpop.trf.xlu0
      %v1206 = vpop.trf.xlu0
      %v1207 = vpop.trf.xlu0
      %v1208 = vpop.trf.xlu0
      %v1209 = vpop.trf.xlu0
      %v1210 = vpop.trf.xlu0
      %v1211 = vpop.trf.xlu0
      %v1212 = vpop.trf.xlu0
      %v1213 = vpop.trf.xlu0
      %v1214 = vpop.trf.xlu0
      %v1215 = vpop.trf.xlu0
      %v1216 = vpop.trf.xlu0
      %v1217 = vpop.trf.xlu0
      %1218 = vxpose.xlu0.b32.start [1/16] %v1060, 128
      %1219 = vxpose.xlu0.b32.cont [2/16] %v1063, 128
      %1220 = vxpose.xlu0.b32.cont [3/16] %v1068, 128
      %1221 = vxpose.xlu0.b32.cont [4/16] %v1071, 128
      %1222 = vxpose.xlu0.b32.cont [5/16] %v1076, 128
      %1223 = vxpose.xlu0.b32.cont [6/16] %v1079, 128
      %1224 = vxpose.xlu0.b32.cont [7/16] %v1084, 128
      %1225 = vxpose.xlu0.b32.cont [8/16] %v1087, 128
      %1226 = vxpose.xlu0.b32.cont [9/16] %v1092, 128
      %1227 = vxpose.xlu0.b32.cont [10/16] %v1095, 128
      %1228 = vxpose.xlu0.b32.cont [11/16] %v1100, 128
      %1229 = vxpose.xlu0.b32.cont [12/16] %v1103, 128
      %1230 = vxpose.xlu0.b32.cont [13/16] %v1108, 128
      %1231 = vxpose.xlu0.b32.cont [14/16] %v1111, 128
      %1232 = vxpose.xlu0.b32.cont [15/16] %v1116, 128
      %1233 = vxpose.xlu0.b32.end [16/16] %v1119, 128
      %v1234 = vpop.trf.xlu0
      %v1235 = vpop.trf.xlu0
      %v1236 = vpop.trf.xlu0
      %v1237 = vpop.trf.xlu0
      %v1238 = vpop.trf.xlu0
      %v1239 = vpop.trf.xlu0
      %v1240 = vpop.trf.xlu0
      %v1241 = vpop.trf.xlu0
      %v1242 = vpop.trf.xlu0
      %v1243 = vpop.trf.xlu0
      %v1244 = vpop.trf.xlu0
      %v1245 = vpop.trf.xlu0
      %v1246 = vpop.trf.xlu0
      %v1247 = vpop.trf.xlu0
      %v1248 = vpop.trf.xlu0
      %v1249 = vpop.trf.xlu0
      %1250 = vxpose.xlu0.b32.start [1/16] %v1124, 128
      %1251 = vxpose.xlu0.b32.cont [2/16] %v1127, 128
      %1252 = vxpose.xlu0.b32.cont [3/16] %v1132, 128
      %1253 = vxpose.xlu0.b32.cont [4/16] %v1135, 128
      %1254 = vxpose.xlu0.b32.cont [5/16] %v1140, 128
      %1255 = vxpose.xlu0.b32.cont [6/16] %v1143, 128
      %1256 = vxpose.xlu0.b32.cont [7/16] %v1148, 128
      %1257 = vxpose.xlu0.b32.cont [8/16] %v1151, 128
      %1258 = vxpose.xlu0.b32.cont [9/16] %v1156, 128
      %1259 = vxpose.xlu0.b32.cont [10/16] %v1159, 128
      %1260 = vxpose.xlu0.b32.cont [11/16] %v1164, 128
      %1261 = vxpose.xlu0.b32.cont [12/16] %v1167, 128
      %1262 = vxpose.xlu0.b32.cont [13/16] %v1172, 128
      %1263 = vxpose.xlu0.b32.cont [14/16] %v1175, 128
      %1264 = vxpose.xlu0.b32.cont [15/16] %v1180, 128
      %1265 = vxpose.xlu0.b32.end [16/16] %v1183, 128
      %v1266 = vpop.trf.xlu0
      %v1267 = vpop.trf.xlu0
      %v1268 = vpop.trf.xlu0
      %v1269 = vpop.trf.xlu0
      %v1270 = vpop.trf.xlu0
      %v1271 = vpop.trf.xlu0
      %v1272 = vpop.trf.xlu0
      %v1273 = vpop.trf.xlu0
      %v1274 = vpop.trf.xlu0
      %v1275 = vpop.trf.xlu0
      %v1276 = vpop.trf.xlu0
      %v1277 = vpop.trf.xlu0
      %v1278 = vpop.trf.xlu0
      %v1279 = vpop.trf.xlu0
      %v1280 = vpop.trf.xlu0
      %v1281 = vpop.trf.xlu0
      %v1282 = vrot.slane %v1202, 4
      %v1283 = vmax.f32 %v1202, %v1282
      %v1284 = vrot.slane %v1283, 2
      %v1285 = vmax.f32 %v1283, %v1284
      %v1286 = vrot.slane %v1285, 1
      %v1287 = vmax.f32 %v1285, %v1286
      %v1288 = vrot.slane %v1234, 4
      %v1289 = vmax.f32 %v1234, %v1288
      %v1290 = vrot.slane %v1289, 2
      %v1291 = vmax.f32 %v1289, %v1290
      %v1292 = vrot.slane %v1291, 1
      %v1293 = vmax.f32 %v1291, %v1292
      %v1294 = vrot.slane %v1266, 4
      %v1295 = vmax.f32 %v1266, %v1294
      %v1296 = vrot.slane %v1295, 2
      %v1297 = vmax.f32 %v1295, %v1296
      %v1298 = vrot.slane %v1297, 1
      %v1299 = vmax.f32 %v1297, %v1298
      %v1300 = vsub.f32 %v1202, %v1287
      %v1301 = vsub.f32 %v1234, %v1293
      %v1302 = vsub.f32 %v1266, %v1299
      %v1303 = vmul.f32 %v1300, 1.442695
      %v1304 = vpow.pop %v1303
      %v1305 = vmul.f32 %v1301, 1.442695
      %v1306 = vpow.pop %v1305
      %v1307 = vmul.f32 %v1302, 1.442695
      %v1308 = vpow.pop %v1307
      %v1309 = vrot.slane %v1304, 4
      %v1310 = vadd.f32 %v1304, %v1309
      %v1311 = vrot.slane %v1310, 2
      %v1312 = vadd.f32 %v1310, %v1311
      %v1313 = vrot.slane %v1312, 1
      %v1314 = vadd.f32 %v1312, %v1313
      %v1315 = vrot.slane %v1306, 4
      %v1316 = vadd.f32 %v1306, %v1315
      %v1317 = vrot.slane %v1316, 2
      %v1318 = vadd.f32 %v1316, %v1317
      %v1319 = vrot.slane %v1318, 1
      %v1320 = vadd.f32 %v1318, %v1319
      %v1321 = vrot.slane %v1308, 4
      %v1322 = vadd.f32 %v1308, %v1321
      %v1323 = vrot.slane %v1322, 2
      %v1324 = vadd.f32 %v1322, %v1323
      %v1325 = vrot.slane %v1324, 1
      %v1326 = vadd.f32 %v1324, %v1325
      %v1327 = vlog2.pop %v1314
      %v1328 = vmul.f32 %v1327, 0.6931472
      %v1329 = vlog2.pop %v1320
      %v1330 = vmul.f32 %v1329, 0.6931472
      %v1331 = vlog2.pop %v1326
      %v1332 = vmul.f32 %v1331, 0.6931472
      %v1333 = vadd.f32 %v1287, %v1328
      %v1334 = vadd.f32 %v1293, %v1330
      %v1335 = vadd.f32 %v1299, %v1332
      %v1336 = vlaneseq
      %v1337 = vshrl.u32 %v1336, 7
      %v1338 = vld [vmem:[%s265] sm:$0x7]
      %v1339 = vlaneseq
      %v1340 = vshrl.u32 %v1339, 7
      %v1341 = vsub.s32 0, %v1340
      %v1342 = vrot.slane %v1338, %v1341
      %v1343 = vlaneseq
      %v1344 = vshrl.u32 %v1343, 7
      %v1345 = vsub.s32 1, %v1344
      %v1346 = vrot.slane %v1338, %v1345
      %v1347 = vlaneseq
      %v1348 = vshrl.u32 %v1347, 7
      %v1349 = vsub.s32 2, %v1348
      %v1350 = vrot.slane %v1338, %v1349
      %vm1351 = vcmp.eq.s32.totalorder %v1337, %v1342
      %vm1352 = vcmp.eq.s32.totalorder %v1337, %v1346
      %vm1353 = vcmp.eq.s32.totalorder %v1337, %v1350
      %v1354 = vsel %vm1351, %v1202, 0.0
      %v1355 = vsel %vm1352, %v1234, 0.0
      %v1356 = vsel %vm1353, %v1266, 0.0
      %v1357 = vrot.slane %v1354, 4
      %v1358 = vadd.f32 %v1354, %v1357
      %v1359 = vrot.slane %v1358, 2
      %v1360 = vadd.f32 %v1358, %v1359
      %v1361 = vrot.slane %v1360, 1
      %v1362 = vadd.f32 %v1360, %v1361
      %v1363 = vrot.slane %v1355, 4
      %v1364 = vadd.f32 %v1355, %v1363
      %v1365 = vrot.slane %v1364, 2
      %v1366 = vadd.f32 %v1364, %v1365
      %v1367 = vrot.slane %v1366, 1
      %v1368 = vadd.f32 %v1366, %v1367
      %v1369 = vrot.slane %v1356, 4
      %v1370 = vadd.f32 %v1356, %v1369
      %v1371 = vrot.slane %v1370, 2
      %v1372 = vadd.f32 %v1370, %v1371
      %v1373 = vrot.slane %v1372, 1
      %v1374 = vadd.f32 %v1372, %v1373
      %v1375 = vsub.f32 %v1333, %v1362
      %v1376 = vsub.f32 %v1334, %v1368
      %v1377 = vsub.f32 %v1335, %v1374
      %v1381 = vcombine.low %v1375, %v1376
      %v1383 = vunpack.c.l.s4 1966171168
      %v1384 = vunpack.c.0.s8 %v1383
      %v1385 = vlaneseq
      %v1386 = vshrl.u32 %v1385, 7
      %v1387 = vsub.s32 %v1384, %v1386
      %v1388 = vrot.slane %v1381, %v1387
      %v1390 = vunpack.c.l.s4 1966171168
      %v1391 = vunpack.c.0.s8 %v1390
      %v1392 = vlaneseq
      %v1393 = vshrl.u32 %v1392, 7
      %v1394 = vsub.s32 %v1391, %v1393
      %v1395 = vrot.slane %v1377, %v1394
      %v1396 = vcombine.low %v1388, %v1395
      %v1398 = vunpack.c.l.s4 1966171168
      %v1399 = vunpack.c.0.s8 %v1398
      %v1400 = vlaneseq
      %v1401 = vshrl.u32 %v1400, 7
      %v1402 = vsub.s32 %v1399, %v1401
      %v1403 = vrot.slane %v1396, %v1402
      %v1405 = vlaneseq
      %vm1406 = vcmp.ge.s32.totalorder %v1405, 0
      %vm1407 = vcmp.lt.s32.totalorder %v1405, 384
      %vm1408 = vmand %vm1406, %vm1407
      %1409 = vst.msk [vmem:[%s270] sm:$0x7] %vm1408, %v1403
      %s1410 = smul.u32 3, %s17
      %p1411 = scmp.lt.s32.totalorder %s1410, 5
      %s1412 = scalar_select %p1411, %s1410, 5
      %s1413 = scalar_lea.vmem %s6, %s1412
      // Predicated region
      $region45: #{edge_type_prediction_forward.1} parent=43 // pred_check
        %p1414 = pneg %p171
      $region46: #{edge_type_prediction_forward.1} parent=43 // pred_check_branch
        %1416 = sbr.rel (%p1414) target = $region48
      $region47: #{edge_type_prediction_forward.1} parent=43 // pred_region
        %s1417 = smul.u32 3, %s17
      $region48: #{edge_type_prediction_forward.1} parent=43 // pred_fallthru
        _
    $region44: #{edge_type_prediction_forward.1} parent=5 // pred_fallthru
      _
    %p1418 = scmp.le.s32.totalorder 2, %s12
    // Predicated region
    $region49: #{edge_type_prediction_forward.1} parent=5 // pred_check
      %p1419 = pneg %p1418
    $region50: #{edge_type_prediction_forward.1} parent=5 // pred_check_branch
      %1421 = sbr.rel (%p1419) target = $region52
    $region51: #{edge_type_prediction_forward.1} parent=5 // pred_region
      %s1422 = ssub.s32 %s12, 2
      // Predicated region
      $region53: #{edge_type_prediction_forward.1} parent=51 // pred_check
        %p1423 = pneg %p177
      $region54: #{edge_type_prediction_forward.1} parent=51 // pred_check_branch
        %1425 = sbr.rel (%p1423) target = $region56
      $region55: #{edge_type_prediction_forward.1} parent=51 // pred_region
        %s1426 = smul.u32 3, %s18
        %p1427 = scmp.lt.s32.totalorder %s1426, 5
        %s1428 = scalar_select %p1427, %s1426, 5
        %s1429 = scalar_lea.vmem %s6, %s1428
      $region56: #{edge_type_prediction_forward.1} parent=51 // pred_fallthru
        _
    $region52: #{edge_type_prediction_forward.1} parent=5 // pred_fallthru
      _
  $region6: #{edge_type_prediction_forward.1} parent=0 // loop_footer
    %s16 = sadd.s32 1, %s12
  $region7: #{edge_type_prediction_forward.1} parent=0 // loop_footer_branch
    %11 = sbr.rel target = $region3
  $region8: #{edge_type_prediction_forward.1} parent=0 // loop_exit
    _

</llo_original>
